<compile_context>
chip_gen: v7x
topology: tpu7x:2x2x1
jax: 0.10.0
libtpu: 0.0.40
codegen_flags: <defaults>
</compile_context>

<pallas_src>
import functools

import jax
import jax.numpy as jnp
from jax.experimental import pallas as pl
from jax.experimental.pallas import tpu as pltpu


def _vmem():
    return pl.BlockSpec(memory_space=pltpu.MemorySpace.VMEM)


# ----------------------------- Pallas kernels ------------------------------

def gnn_stack_kernel(a_ref, x_ref, *refs, num_layers):
    """Fused GNN stack: num_layers x [GCNConv -> ReLU -> Linear -> ReLU].

    refs = [wg0, bg0, wt0, bt0, ..., wg_{L-1}, bg_{L-1}, wt_{L-1}, bt_{L-1},
            node_emb_out]
    """
    a = a_ref[...]
    h = x_ref[...]
    for i in range(num_layers):
        wg = refs[4 * i + 0][...]
        bg = refs[4 * i + 1][...]
        wt = refs[4 * i + 2][...]
        bt = refs[4 * i + 3][...]
        cin, cout = wg.shape
        # GCNConv: A_hat @ X @ W + b — pick the cheaper association statically.
        if cin > cout:
            xw = jnp.dot(h, wg, preferred_element_type=jnp.float32)
            h = jnp.dot(a, xw, preferred_element_type=jnp.float32) + bg
        else:
            ax = jnp.dot(a, h, preferred_element_type=jnp.float32)
            h = jnp.dot(ax, wg, preferred_element_type=jnp.float32) + bg
        h = jnp.maximum(h, 0.0)                       # gnn_non_linear
        # TransformerLayer effective forward: relu(Linear(x)) (attn discarded)
        h = jnp.dot(h, wt, preferred_element_type=jnp.float32) + bt
        h = jnp.maximum(h, 0.0)                       # relu o relu == relu
    refs[-1][...] = h


def pool_proto_kernel(xr_ref, pw_ref, pb_ref, proto_ref, p2_ref,
                      ge_ref, dist_ref, logit_ref, prob_ref,
                      *, num_classes, per_class, epsilon):
    """Fused pooling_mlp + prototype head."""
    # pooling_mlp: graph_emb = X_r @ Wp + bp
    g = jnp.dot(xr_ref[...], pw_ref[...],
                preferred_element_type=jnp.float32) + pb_ref[...]
    ge_ref[...] = g

    # prototype distances: ||g - p||^2 = -2 g p^T + ||g||^2 + ||p||^2
    p = proto_ref[...]                                            # [P, D]
    xp = jax.lax.dot_general(g, p, (((1,), (1,)), ((), ())),
                             preferred_element_type=jnp.float32)  # [B, P]
    x2 = jnp.sum(g * g, axis=1, keepdims=True)                    # [B, 1]
    dist = jnp.maximum(-2.0 * xp + x2 + p2_ref[...], 0.0)         # clamp >= 0
    dist_ref[...] = dist

    # similarity = log((d+1)/(d+eps)) computed divide-free.
    sim = jnp.log(dist + 1.0) - jnp.log(dist + epsilon)

    # logits: per-class sum of similarities (tiny VPU/XLU reduce, no MXU push)
    cols = [jnp.sum(sim[:, c * per_class:(c + 1) * per_class],
                    axis=-1, keepdims=True)
            for c in range(num_classes)]
    logits = jnp.concatenate(cols, axis=-1)
    logit_ref[...] = logits

    # softmax(dim=-1); denominator via EUP approx reciprocal.
    m = jnp.max(logits, axis=-1, keepdims=True)
    e = jnp.exp(logits - m)
    prob_ref[...] = e * pl.reciprocal(jnp.sum(e, axis=-1, keepdims=True),
                                      approx=True)


# ----------------------------- JAX wrappers --------------------------------

def gnn_stack(a_hat, x, gcn_params, trans_params):
    num_layers = len(gcn_params)
    inputs = [a_hat, x]
    for (wg, bg), (wt, bt) in zip(gcn_params, trans_params):
        inputs += [wg, bg, wt, bt]
    n = x.shape[0]
    out_dim = trans_params[-1][0].shape[1]
    kernel = functools.partial(gnn_stack_kernel, num_layers=num_layers)
    return pl.pallas_call(
        kernel,
        out_shape=jax.ShapeDtypeStruct((n, out_dim), jnp.float32),
        in_specs=[_vmem() for _ in inputs],
        out_specs=_vmem(),
    )(*inputs)


def pool_and_prototype_head(xr, pool_w, pool_b, prototypes, proto_sq_norm,
                            num_classes, per_class, epsilon=1e-4):
    b = xr.shape[0]
    d = pool_w.shape[1]
    p = prototypes.shape[0]
    kernel = functools.partial(pool_proto_kernel, num_classes=num_classes,
                               per_class=per_class, epsilon=epsilon)
    return pl.pallas_call(
        kernel,
        out_shape=(
            jax.ShapeDtypeStruct((b, d), jnp.float32),            # graph_emb
            jax.ShapeDtypeStruct((b, p), jnp.float32),            # min_distances
            jax.ShapeDtypeStruct((b, num_classes), jnp.float32),  # logits
            jax.ShapeDtypeStruct((b, num_classes), jnp.float32),  # probs
        ),
        in_specs=[_vmem() for _ in range(5)],
        out_specs=tuple(_vmem() for _ in range(4)),
    )(xr, pool_w, pool_b, prototypes, proto_sq_norm)


def gcnnet_forward(x, a_hat, params):
    """Mirrors GCNNet.forward (enable_prot=True branch)."""
    node_emb = gnn_stack(a_hat, x, params["gcn"], params["transformer"])

    batch_size = params["batch_size"]
    # Implicit contract: nodes are graph-major & in order, so reshape == per-graph concat.
    assert node_emb.shape[0] == batch_size * params["num_gene"]
    xr = node_emb.reshape(batch_size, -1)   # cheap wrapper-side XLA reshape

    graph_emb, min_dist, logits, probs = pool_and_prototype_head(
        xr, params["pool_w"], params["pool_b"],
        params["prototypes"], params["proto_sq_norm"],
        num_classes=params["output_dim"],
        per_class=params["num_prototypes_per_class"])
    return logits, probs, node_emb, graph_emb, min_dist


# ----------------------------- setup / main ---------------------------------

def build_normalized_adjacency(edge_index, num_nodes):
    """Dense D^{-1/2} (A + I) D^{-1/2} — plain-JAX glue (adj_normlize=True)."""
    src, dst = edge_index
    a = jnp.zeros((num_nodes, num_nodes), jnp.float32)
    a = a.at[src, dst].set(1.0)
    a = a.at[dst, src].set(1.0)
    a = a + jnp.eye(num_nodes, dtype=jnp.float32)
    deg = jnp.sum(a, axis=1)
    dinv = 1.0 / jnp.sqrt(deg)
    return a * dinv[:, None] * dinv[None, :]


def init_params(key, input_dim, latent_dim, num_gene, batch_size,
                output_dim, num_prototypes_per_class):
    dense_dim = latent_dim[-1]
    keys = jax.random.split(key, 16)
    ki = iter(range(16))

    def uni(k, shape, fan_in):
        bound = 1.0 / jnp.sqrt(jnp.float32(fan_in))
        return jax.random.uniform(k, shape, jnp.float32, -bound, bound)

    gcn, transformer = [], []
    dims = [input_dim] + list(latent_dim)
    for i in range(len(latent_dim)):
        cin, cout = dims[i], dims[i + 1]
        wg = uni(keys[next(ki)], (cin, cout), cin)
        bg = jnp.zeros((1, cout), jnp.float32)     # GCNConv bias init = zeros
        gcn.append((wg, bg))
        wt = uni(keys[next(ki)], (cout, cout), cout)
        bt = uni(keys[next(ki)], (1, cout), cout)
        transformer.append((wt, bt))

    pool_in = dense_dim * num_gene
    pool_w = uni(keys[next(ki)], (pool_in, dense_dim), pool_in)
    pool_b = uni(keys[next(ki)], (1, dense_dim), pool_in)

    num_prototypes = output_dim * num_prototypes_per_class
    prototypes = jax.random.uniform(keys[next(ki)], (num_prototypes, dense_dim),
                                    jnp.float32)   # torch.rand
    # Precompute ||P||^2 once (prototypes are parameters / constant per forward).
    proto_sq_norm = jnp.sum(prototypes * prototypes, axis=1, keepdims=True).T  # [1, P]

    return dict(gcn=gcn, transformer=transformer, pool_w=pool_w, pool_b=pool_b,
                prototypes=prototypes, proto_sq_norm=proto_sq_norm,
                batch_size=batch_size, num_gene=num_gene,
                output_dim=output_dim,
                num_prototypes_per_class=num_prototypes_per_class)


if __name__ == "__main__":
    # model_args (fixed, deterministic): latent_dim=[16,16], adj_normlize=True,
    # emb_normlize=False, enable_prot=True, num_prototypes_per_class=4
    batch_size = 2
    num_gene = 8                    # nodes per graph
    num_nodes = batch_size * num_gene
    input_dim = 8
    latent_dim = [16, 16]
    output_dim = 3
    num_prototypes_per_class = 4

    key = jax.random.PRNGKey(0)
    k_x, k_p = jax.random.split(key)

    # node features [N, input_dim]
    x = jax.random.normal(k_x, (num_nodes, input_dim), jnp.float32)

    # per-graph ring edges
    src, dst = [], []
    for g in range(batch_size):
        base = g * num_gene
        for i in range(num_gene):
            src.append(base + i)
            dst.append(base + (i + 1) % num_gene)
    edge_index = (jnp.array(src, jnp.int32), jnp.array(dst, jnp.int32))
    a_hat = build_normalized_adjacency(edge_index, num_nodes)

    params = init_params(k_p, input_dim, latent_dim, num_gene, batch_size,
                         output_dim, num_prototypes_per_class)

    logits, probs, node_emb, graph_emb, min_dist = gcnnet_forward(x, a_hat, params)
    jax.block_until_ready((logits, probs, node_emb, graph_emb, min_dist))

    assert logits.shape == (batch_size, output_dim)
    assert probs.shape == (batch_size, output_dim)
    assert node_emb.shape == (num_nodes, latent_dim[-1])
    assert graph_emb.shape == (batch_size, latent_dim[-1])
    assert min_dist.shape == (batch_size, output_dim * num_prototypes_per_class)
    print("KERNEL_OK")
</pallas_src>

<mosaic_0001>
module attributes {stable_mosaic.version = 11 : i64} {
  func.func @gnn_stack_kernel(%arg0: memref<16x16xf32, #tpu.memory_space<vmem>>, %arg1: memref<16x8xf32, #tpu.memory_space<vmem>>, %arg2: memref<8x16xf32, #tpu.memory_space<vmem>>, %arg3: memref<1x16xf32, #tpu.memory_space<vmem>>, %arg4: memref<16x16xf32, #tpu.memory_space<vmem>>, %arg5: memref<1x16xf32, #tpu.memory_space<vmem>>, %arg6: memref<16x16xf32, #tpu.memory_space<vmem>>, %arg7: memref<1x16xf32, #tpu.memory_space<vmem>>, %arg8: memref<16x16xf32, #tpu.memory_space<vmem>>, %arg9: memref<1x16xf32, #tpu.memory_space<vmem>>, %arg10: memref<16x16xf32, #tpu.memory_space<vmem>>) attributes {dimension_semantics = [], scalar_prefetch = 0 : i64, scratch_operands = 0 : i64, tpu.core_type = #tpu.core_type<tc>} {
    %c0 = arith.constant 0 : index
    %c0_0 = arith.constant 0 : index
    %0 = vector.load %arg0[%c0, %c0_0] : memref<16x16xf32, #tpu.memory_space<vmem>>, vector<16x16xf32>
    %c0_1 = arith.constant 0 : index
    %c0_2 = arith.constant 0 : index
    %1 = vector.load %arg1[%c0_1, %c0_2] : memref<16x8xf32, #tpu.memory_space<vmem>>, vector<16x8xf32>
    %c0_3 = arith.constant 0 : index
    %c0_4 = arith.constant 0 : index
    %2 = vector.load %arg2[%c0_3, %c0_4] : memref<8x16xf32, #tpu.memory_space<vmem>>, vector<8x16xf32>
    %c0_5 = arith.constant 0 : index
    %c0_6 = arith.constant 0 : index
    %3 = vector.load %arg3[%c0_5, %c0_6] : memref<1x16xf32, #tpu.memory_space<vmem>>, vector<1x16xf32>
    %c0_7 = arith.constant 0 : index
    %c0_8 = arith.constant 0 : index
    %4 = vector.load %arg4[%c0_7, %c0_8] : memref<16x16xf32, #tpu.memory_space<vmem>>, vector<16x16xf32>
    %c0_9 = arith.constant 0 : index
    %c0_10 = arith.constant 0 : index
    %5 = vector.load %arg5[%c0_9, %c0_10] : memref<1x16xf32, #tpu.memory_space<vmem>>, vector<1x16xf32>
    %cst = arith.constant dense<0.000000e+00> : vector<16x8xf32>
    %6 = tpu.matmul %0, %1, %cst {dimension_numbers = #tpu.dot_dimension_numbers<[1], [0], [0], [1], [0, 0, 1, 1], [], []>} : vector<16x16xf32>, vector<16x8xf32>, vector<16x8xf32> -> vector<16x8xf32>
    %cst_11 = arith.constant dense<0.000000e+00> : vector<16x16xf32>
    %7 = tpu.matmul %6, %2, %cst_11 {dimension_numbers = #tpu.dot_dimension_numbers<[1], [0], [0], [1], [0, 0, 1, 1], [], []>} : vector<16x8xf32>, vector<8x16xf32>, vector<16x16xf32> -> vector<16x16xf32>
    %8 = vector.broadcast %3 : vector<1x16xf32> to vector<16x16xf32>
    %9 = arith.addf %7, %8 : vector<16x16xf32>
    %cst_12 = arith.constant 0.000000e+00 : f32
    %10 = vector.broadcast %cst_12 : f32 to vector<16x16xf32>
    %11 = arith.maximumf %9, %10 : vector<16x16xf32>
    %cst_13 = arith.constant dense<0.000000e+00> : vector<16x16xf32>
    %12 = tpu.matmul %11, %4, %cst_13 {dimension_numbers = #tpu.dot_dimension_numbers<[1], [0], [0], [1], [0, 0, 1, 1], [], []>} : vector<16x16xf32>, vector<16x16xf32>, vector<16x16xf32> -> vector<16x16xf32>
    %13 = vector.broadcast %5 : vector<1x16xf32> to vector<16x16xf32>
    %14 = arith.addf %12, %13 : vector<16x16xf32>
    %cst_14 = arith.constant 0.000000e+00 : f32
    %15 = vector.broadcast %cst_14 : f32 to vector<16x16xf32>
    %16 = arith.maximumf %14, %15 : vector<16x16xf32>
    %c0_15 = arith.constant 0 : index
    %c0_16 = arith.constant 0 : index
    %17 = vector.load %arg6[%c0_15, %c0_16] : memref<16x16xf32, #tpu.memory_space<vmem>>, vector<16x16xf32>
    %c0_17 = arith.constant 0 : index
    %c0_18 = arith.constant 0 : index
    %18 = vector.load %arg7[%c0_17, %c0_18] : memref<1x16xf32, #tpu.memory_space<vmem>>, vector<1x16xf32>
    %c0_19 = arith.constant 0 : index
    %c0_20 = arith.constant 0 : index
    %19 = vector.load %arg8[%c0_19, %c0_20] : memref<16x16xf32, #tpu.memory_space<vmem>>, vector<16x16xf32>
    %c0_21 = arith.constant 0 : index
    %c0_22 = arith.constant 0 : index
    %20 = vector.load %arg9[%c0_21, %c0_22] : memref<1x16xf32, #tpu.memory_space<vmem>>, vector<1x16xf32>
    %cst_23 = arith.constant dense<0.000000e+00> : vector<16x16xf32>
    %21 = tpu.matmul %0, %16, %cst_23 {dimension_numbers = #tpu.dot_dimension_numbers<[1], [0], [0], [1], [0, 0, 1, 1], [], []>} : vector<16x16xf32>, vector<16x16xf32>, vector<16x16xf32> -> vector<16x16xf32>
    %cst_24 = arith.constant dense<0.000000e+00> : vector<16x16xf32>
    %22 = tpu.matmul %21, %17, %cst_24 {dimension_numbers = #tpu.dot_dimension_numbers<[1], [0], [0], [1], [0, 0, 1, 1], [], []>} : vector<16x16xf32>, vector<16x16xf32>, vector<16x16xf32> -> vector<16x16xf32>
    %23 = vector.broadcast %18 : vector<1x16xf32> to vector<16x16xf32>
    %24 = arith.addf %22, %23 : vector<16x16xf32>
    %cst_25 = arith.constant 0.000000e+00 : f32
    %25 = vector.broadcast %cst_25 : f32 to vector<16x16xf32>
    %26 = arith.maximumf %24, %25 : vector<16x16xf32>
    %cst_26 = arith.constant dense<0.000000e+00> : vector<16x16xf32>
    %27 = tpu.matmul %26, %19, %cst_26 {dimension_numbers = #tpu.dot_dimension_numbers<[1], [0], [0], [1], [0, 0, 1, 1], [], []>} : vector<16x16xf32>, vector<16x16xf32>, vector<16x16xf32> -> vector<16x16xf32>
    %28 = vector.broadcast %20 : vector<1x16xf32> to vector<16x16xf32>
    %29 = arith.addf %27, %28 : vector<16x16xf32>
    %cst_27 = arith.constant 0.000000e+00 : f32
    %30 = vector.broadcast %cst_27 : f32 to vector<16x16xf32>
    %31 = arith.maximumf %29, %30 : vector<16x16xf32>
    %c0_28 = arith.constant 0 : index
    %c0_29 = arith.constant 0 : index
    %32 = vector.load %arg10[%c0_28, %c0_29] : memref<16x16xf32, #tpu.memory_space<vmem>>, vector<16x16xf32>
    tpu.vector_store %arg10[%c0_28, %c0_29], %31 {strides = array<i32>} : memref<16x16xf32, #tpu.memory_space<vmem>>, vector<16x16xf32>,
    return
  }
}

</mosaic_0001>

<llo_original>
// kernel: tpu_custom_call.1
$region0: #{tpu_custom_call.1}
  #allocation0 [shape = 'u32[]', space=smem, size = 0x4, offset = 0x4, fixed_abs, tag = 'smem constant byte address 0x4 - core index']
  #allocation1 [shape = 'u32[144,128]{1,0:T(1,128)}', space=vmem, size = 0x12000, scoped, tag = 'internal scratch']
  %s0 = inlined_call_operand.vmem [shape: f32[16,16], index: 0, kind: input, shape index: {}]
  %s1 = inlined_call_operand.vmem [shape: f32[16,8], index: 1, kind: input, shape index: {}]
  %s2 = inlined_call_operand.hbm [shape: f32[8,16], index: 2, kind: input, shape index: {}]
  %s3 = inlined_call_operand.vmem [shape: f32[1,16], index: 3, kind: input, shape index: {}]
  %s4 = inlined_call_operand.vmem [shape: f32[16,16], index: 4, kind: input, shape index: {}]
  %s5 = inlined_call_operand.vmem [shape: f32[1,16], index: 5, kind: input, shape index: {}]
  %s6 = inlined_call_operand.hbm [shape: f32[16,16], index: 6, kind: input, shape index: {}]
  %s7 = inlined_call_operand.hbm [shape: f32[1,16], index: 7, kind: input, shape index: {}]
  %s8 = inlined_call_operand.vmem [shape: f32[16,16], index: 8, kind: input, shape index: {}]
  %s9 = inlined_call_operand.vmem [shape: f32[1,16], index: 9, kind: input, shape index: {}]
  %s10 = inlined_call_operand.hbm [shape: f32[16,16], index: 10, kind: output, shape index: {}]
  %s11 = sld [smem:[#allocation0]]
  $region62: #{tpu_custom_call.1} parent=0
    _
  %s13 = ssub.s32 1, %s11
  %s14 = scalar_select 0, %s13, %s11
  $region1: #{tpu_custom_call.1} parent=0
    #allocation2 [shape = 'u8[4096]{0}', space=vmem, size = 0x1000, scoped, tag = 'input window, operand 2, single buffered']
    #allocation3 [shape = 's32[1]{0}', space=sflag, size = 0x4, scoped, tag = 'scoped memory for tpu_custom_call.1']
    #allocation4 [shape = 's32[1]{0}', space=sflag, size = 0x4, scoped, tag = 'scoped memory for tpu_custom_call.1']
    #allocation5 [shape = 'u8[8192]{0}', space=vmem, size = 0x2000, scoped, tag = 'input window, operand 6, single buffered']
    #allocation6 [shape = 's32[1]{0}', space=sflag, size = 0x4, scoped, tag = 'scoped memory for tpu_custom_call.1']
    #allocation7 [shape = 'u8[512]{0}', space=vmem, size = 0x400, scoped, tag = 'input window, operand 7, single buffered']
    #allocation8 [shape = 'u8[8192]{0}', space=vmem, size = 0x2000, scoped, tag = 'output window, operand 0, single buffered']
    %15 = vsyncpa [#allocation3], 0
    %16 = vsyncpa [#allocation6], 0
    %17 = vsyncpa [#allocation4], 0
    // Predicated region
    $region2: #{tpu_custom_call.1} parent=1 // pred_check
      _
    $region3: #{tpu_custom_call.1} parent=1 // pred_check_branch
      %19 = sbr.rel (0) target = $region5
    $region4: #{tpu_custom_call.1} parent=1 // pred_region
      _
    $region5: #{tpu_custom_call.1} parent=1 // pred_fallthru
      _
    // Predicated region
    $region6: #{tpu_custom_call.1} parent=1 // pred_check
      _
    $region7: #{tpu_custom_call.1} parent=1 // pred_check_branch
      %21 = sbr.rel (0) target = $region9
    $region8: #{tpu_custom_call.1} parent=1 // pred_region
      _
    $region9: #{tpu_custom_call.1} parent=1 // pred_fallthru
      _
    // Predicated region
    $region10: #{tpu_custom_call.1} parent=1 // pred_check
      _
    $region11: #{tpu_custom_call.1} parent=1 // pred_check_branch
      %23 = sbr.rel (0) target = $region13
    $region12: #{tpu_custom_call.1} parent=1 // pred_region
      %s25 = ssub.s32 128, 128
      %26 = vsyncadd [#allocation3], %s25
      %s28 = sshll.u32 [#allocation2], 4
      %s29 = int_to_ptr.vmem [resolvable:$true] %s28
      %31 = dma.hbm_to_vmem [thread:$0]  %s2, 128, %s29, [#allocation3]
    $region13: #{tpu_custom_call.1} parent=1 // pred_fallthru
      _
    // Predicated region
    $region14: #{tpu_custom_call.1} parent=1 // pred_check
      _
    $region15: #{tpu_custom_call.1} parent=1 // pred_check_branch
      %33 = sbr.rel (0) target = $region17
    $region16: #{tpu_custom_call.1} parent=1 // pred_region
      _
    $region17: #{tpu_custom_call.1} parent=1 // pred_fallthru
      _
    // Predicated region
    $region18: #{tpu_custom_call.1} parent=1 // pred_check
      _
    $region19: #{tpu_custom_call.1} parent=1 // pred_check_branch
      %35 = sbr.rel (0) target = $region21
    $region20: #{tpu_custom_call.1} parent=1 // pred_region
      _
    $region21: #{tpu_custom_call.1} parent=1 // pred_fallthru
      _
    // Predicated region
    $region22: #{tpu_custom_call.1} parent=1 // pred_check
      _
    $region23: #{tpu_custom_call.1} parent=1 // pred_check_branch
      %37 = sbr.rel (0) target = $region25
    $region24: #{tpu_custom_call.1} parent=1 // pred_region
      _
    $region25: #{tpu_custom_call.1} parent=1 // pred_fallthru
      _
    // Predicated region
    $region26: #{tpu_custom_call.1} parent=1 // pred_check
      _
    $region27: #{tpu_custom_call.1} parent=1 // pred_check_branch
      %39 = sbr.rel (0) target = $region29
    $region28: #{tpu_custom_call.1} parent=1 // pred_region
      %s41 = ssub.s32 256, 256
      %42 = vsyncadd [#allocation6], %s41
      %s43 = sshll.u32 [#allocation5], 4
      %s44 = int_to_ptr.vmem [resolvable:$true] %s43
      %49 = dma.hbm_to_vmem [thread:$0]  %s6, 256, %s44, [#allocation6], 128, 128, 8
    $region29: #{tpu_custom_call.1} parent=1 // pred_fallthru
      _
    // Predicated region
    $region30: #{tpu_custom_call.1} parent=1 // pred_check
      _
    $region31: #{tpu_custom_call.1} parent=1 // pred_check_branch
      %51 = sbr.rel (0) target = $region33
    $region32: #{tpu_custom_call.1} parent=1 // pred_region
      %s53 = ssub.s32 16, 16
      %54 = vsyncadd [#allocation6], %s53
      %s56 = sshll.u32 [#allocation7], 4
      %s57 = int_to_ptr.vmem [resolvable:$true] %s56
      %59 = dma.hbm_to_vmem [thread:$0]  %s7, 16, %s57, [#allocation6]
    $region33: #{tpu_custom_call.1} parent=1 // pred_fallthru
      _
    // Predicated region
    $region34: #{tpu_custom_call.1} parent=1 // pred_check
      _
    $region35: #{tpu_custom_call.1} parent=1 // pred_check_branch
      %61 = sbr.rel (0) target = $region37
    $region36: #{tpu_custom_call.1} parent=1 // pred_region
      _
    $region37: #{tpu_custom_call.1} parent=1 // pred_fallthru
      _
    // Predicated region
    $region38: #{tpu_custom_call.1} parent=1 // pred_check
      _
    $region39: #{tpu_custom_call.1} parent=1 // pred_check_branch
      %63 = sbr.rel (0) target = $region41
    $region40: #{tpu_custom_call.1} parent=1 // pred_region
      _
    $region41: #{tpu_custom_call.1} parent=1 // pred_fallthru
      _
    // Predicated region
    $region42: #{tpu_custom_call.1} parent=1 // pred_check
      _
    $region43: #{tpu_custom_call.1} parent=1 // pred_check_branch
      %65 = sbr.rel (0) target = $region45
    $region44: #{tpu_custom_call.1} parent=1 // pred_region
      %66 = dma.done [#allocation3], 128
    $region45: #{tpu_custom_call.1} parent=1 // pred_fallthru
      _
    // Predicated region
    $region46: #{tpu_custom_call.1} parent=1 // pred_check
      _
    $region47: #{tpu_custom_call.1} parent=1 // pred_check_branch
      %68 = sbr.rel (0) target = $region49
    $region48: #{tpu_custom_call.1} parent=1 // pred_region
      %69 = dma.done [#allocation6], 256
    $region49: #{tpu_custom_call.1} parent=1 // pred_fallthru
      _
    // Predicated region
    $region50: #{tpu_custom_call.1} parent=1 // pred_check
      _
    $region51: #{tpu_custom_call.1} parent=1 // pred_check_branch
      %71 = sbr.rel (0) target = $region53
    $region52: #{tpu_custom_call.1} parent=1 // pred_region
      %72 = dma.done [#allocation6], 16
    $region53: #{tpu_custom_call.1} parent=1 // pred_fallthru
      _
    %v73 = vld [vmem:[%s0] sm:$0xff]
    %v74 = vld [vmem:[%s0 + $0x8] sm:$0xff]
    %v75 = vld [vmem:[%s1] sm:$0xff]
    %v76 = vld [vmem:[%s1 + $0x8] sm:$0xff]
    %v77 = vld [vmem:[#allocation2] sm:$0xff]
    %v78 = vld [vmem:[%s3] sm:$0x1]
    %v79 = vld [vmem:[%s4] sm:$0xff]
    %v80 = vld [vmem:[%s4 + $0x8] sm:$0xff]
    %v81 = vld [vmem:[%s5] sm:$0x1]
    %vm82 = vcmask 130048
    %v84 = vsel %vm82, %v73, 0
    %v87 = vsel %vm82, %v74, 0
    %89 = vmatprep.subr.mxu0 0.0
    %90 = vmatpush1.msra.mxu0 %v75
    %91 = vmatprep.subr.mxu0 0.0
    %92 = vmatpush1.msra.mxu0 %v76
    %93 = vmatprep.subr.mxu0 0.0
    %94 = vmatpush1.msra.mxu0 0.0
    %95 = vmatprep.subr.mxu0 0.0
    %96 = vmatpush1.msra.mxu0 0.0
    %97 = vmatprep.subr.mxu0 0.0
    %98 = vmatpush1.msra.mxu0 0.0
    %99 = vmatprep.subr.mxu0 0.0
    %100 = vmatpush1.msra.mxu0 0.0
    %101 = vmatprep.subr.mxu0 0.0
    %102 = vmatpush1.msra.mxu0 0.0
    %103 = vmatprep.subr.mxu0 0.0
    %104 = vmatpush1.msra.mxu0 0.0
    %105 = vmatprep.subr.mxu0 0.0
    %106 = vmatpush1.msra.mxu0 0.0
    %107 = vmatprep.subr.mxu0 0.0
    %108 = vmatpush1.msra.mxu0 0.0
    %109 = vmatprep.subr.mxu0 0.0
    %110 = vmatpush1.msra.mxu0 0.0
    %111 = vmatprep.subr.mxu0 0.0
    %112 = vmatpush1.msra.mxu0 0.0
    %113 = vmatprep.subr.mxu0 0.0
    %114 = vmatpush1.msra.mxu0 0.0
    %115 = vmatprep.subr.mxu0 0.0
    %116 = vmatpush1.msra.mxu0 0.0
    %117 = vmatprep.subr.mxu0 0.0
    %118 = vmatpush1.msra.mxu0 0.0
    %119 = vmatprep.subr.mxu0 0.0
    %120 = vmatpush1.msra.mxu0 0.0
    %121 = vmatprep.subr.mxu0 0.0
    %122 = vmatpush1.msra.mxu0 0.0
    %123 = vmatprep.subr.mxu0 0.0
    %124 = vmatpush1.msra.mxu0 0.0
    %125 = vmatprep.subr.mxu0 0.0
    %126 = vmatpush1.msra.mxu0 0.0
    %127 = vmatprep.subr.mxu0 0.0
    %128 = vmatpush1.msra.mxu0 0.0
    %129 = vmatprep.subr.mxu0 0.0
    %130 = vmatpush1.msra.mxu0 0.0
    %131 = vmatprep.subr.mxu0 0.0
    %132 = vmatpush1.msra.mxu0 0.0
    %133 = vmatprep.subr.mxu0 0.0
    %134 = vmatpush1.msra.mxu0 0.0
    %135 = vmatprep.subr.mxu0 0.0
    %136 = vmatpush1.msra.mxu0 0.0
    %137 = vmatprep.subr.mxu0 0.0
    %138 = vmatpush1.msra.mxu0 0.0
    %139 = vmatprep.subr.mxu0 0.0
    %140 = vmatpush1.msra.mxu0 0.0
    %141 = vmatprep.subr.mxu0 0.0
    %142 = vmatpush1.msra.mxu0 0.0
    %143 = vmatprep.subr.mxu0 0.0
    %144 = vmatpush1.msra.mxu0 0.0
    %145 = vmatprep.subr.mxu0 0.0
    %146 = vmatpush1.msra.mxu0 0.0
    %147 = vmatprep.subr.mxu0 0.0
    %148 = vmatpush1.msra.mxu0 0.0
    %149 = vmatprep.subr.mxu0 0.0
    %150 = vmatpush1.msra.mxu0 0.0
    %151 = vmatprep.subr.mxu0 0.0
    %152 = vmatpush1.msra.mxu0 0.0
    %153 = vmatprep.mubr.f32.mxu0 0.0
    %154 = vmatmul.mubr.f32.gmra.mrb[0].mxu0 %v84
    %v155 = vpop.f32.mrb[0].mxu0
    %v156 = vadd.f32 0.0, %v155
    %v157 = vpop.f32.mrb[0].mxu0
    %158 = vmatprep.mubr.f32.mxu0 0.0
    %159 = vmatmul.mubr.f32.gmra.mrb[0].mxu0 %v87
    %v160 = vpop.f32.mrb[0].mxu0
    %v161 = vadd.f32 0.0, %v160
    %v162 = vpop.f32.mrb[0].mxu0
    %163 = vdwg.mxu0
    %v165 = vlaneseq
    %v166 = vshrl.u32 %v165, 7
    %v167 = vsub.s32 0, %v166
    %v168 = vrot.slane %v78, %v167
    %vm170 = vcmask 64512
    %v172 = vsel %vm170, %v156, 0
    %v175 = vsel %vm170, %v161, 0
    %177 = vmatprep.subr.mxu0 0.0
    %178 = vmatpush1.msra.mxu0 %v77
    %179 = vmatprep.subr.mxu0 0.0
    %180 = vmatpush1.msra.mxu0 0.0
    %181 = vmatprep.subr.mxu0 0.0
    %182 = vmatpush1.msra.mxu0 0.0
    %183 = vmatprep.subr.mxu0 0.0
    %184 = vmatpush1.msra.mxu0 0.0
    %185 = vmatprep.subr.mxu0 0.0
    %186 = vmatpush1.msra.mxu0 0.0
    %187 = vmatprep.subr.mxu0 0.0
    %188 = vmatpush1.msra.mxu0 0.0
    %189 = vmatprep.subr.mxu0 0.0
    %190 = vmatpush1.msra.mxu0 0.0
    %191 = vmatprep.subr.mxu0 0.0
    %192 = vmatpush1.msra.mxu0 0.0
    %193 = vmatprep.subr.mxu0 0.0
    %194 = vmatpush1.msra.mxu0 0.0
    %195 = vmatprep.subr.mxu0 0.0
    %196 = vmatpush1.msra.mxu0 0.0
    %197 = vmatprep.subr.mxu0 0.0
    %198 = vmatpush1.msra.mxu0 0.0
    %199 = vmatprep.subr.mxu0 0.0
    %200 = vmatpush1.msra.mxu0 0.0
    %201 = vmatprep.subr.mxu0 0.0
    %202 = vmatpush1.msra.mxu0 0.0
    %203 = vmatprep.subr.mxu0 0.0
    %204 = vmatpush1.msra.mxu0 0.0
    %205 = vmatprep.subr.mxu0 0.0
    %206 = vmatpush1.msra.mxu0 0.0
    %207 = vmatprep.subr.mxu0 0.0
    %208 = vmatpush1.msra.mxu0 0.0
    %209 = vmatprep.subr.mxu0 0.0
    %210 = vmatpush1.msra.mxu0 0.0
    %211 = vmatprep.subr.mxu0 0.0
    %212 = vmatpush1.msra.mxu0 0.0
    %213 = vmatprep.subr.mxu0 0.0
    %214 = vmatpush1.msra.mxu0 0.0
    %215 = vmatprep.subr.mxu0 0.0
    %216 = vmatpush1.msra.mxu0 0.0
    %217 = vmatprep.subr.mxu0 0.0
    %218 = vmatpush1.msra.mxu0 0.0
    %219 = vmatprep.subr.mxu0 0.0
    %220 = vmatpush1.msra.mxu0 0.0
    %221 = vmatprep.subr.mxu0 0.0
    %222 = vmatpush1.msra.mxu0 0.0
    %223 = vmatprep.subr.mxu0 0.0
    %224 = vmatpush1.msra.mxu0 0.0
    %225 = vmatprep.subr.mxu0 0.0
    %226 = vmatpush1.msra.mxu0 0.0
    %227 = vmatprep.subr.mxu0 0.0
    %228 = vmatpush1.msra.mxu0 0.0
    %229 = vmatprep.subr.mxu0 0.0
    %230 = vmatpush1.msra.mxu0 0.0
    %231 = vmatprep.subr.mxu0 0.0
    %232 = vmatpush1.msra.mxu0 0.0
    %233 = vmatprep.subr.mxu0 0.0
    %234 = vmatpush1.msra.mxu0 0.0
    %235 = vmatprep.subr.mxu0 0.0
    %236 = vmatpush1.msra.mxu0 0.0
    %237 = vmatprep.subr.mxu0 0.0
    %238 = vmatpush1.msra.mxu0 0.0
    %239 = vmatprep.subr.mxu0 0.0
    %240 = vmatpush1.msra.mxu0 0.0
    %241 = vmatprep.mubr.f32.mxu0 0.0
    %242 = vmatmul.mubr.f32.gmra.mrb[0].mxu0 %v172
    %v243 = vpop.f32.mrb[0].mxu0
    %v244 = vadd.f32 %v168, %v243
    %v245 = vpop.f32.mrb[0].mxu0
    %246 = vmatprep.mubr.f32.mxu0 0.0
    %247 = vmatmul.mubr.f32.gmra.mrb[0].mxu0 %v175
    %v248 = vpop.f32.mrb[0].mxu0
    %v249 = vadd.f32 %v168, %v248
    %v250 = vpop.f32.mrb[0].mxu0
    %251 = vdwg.mxu0
    %v252 = vmax.f32 %v244, 0.0
    %v253 = vmax.f32 %v249, 0.0
    %v255 = vlaneseq
    %v256 = vshrl.u32 %v255, 7
    %v257 = vsub.s32 0, %v256
    %v258 = vrot.slane %v81, %v257
    %v261 = vsel %vm82, %v252, 0
    %v264 = vsel %vm82, %v253, 0
    %266 = vmatprep.subr.mxu0 0.0
    %267 = vmatpush1.msra.mxu0 %v79
    %268 = vmatprep.subr.mxu0 0.0
    %269 = vmatpush1.msra.mxu0 %v80
    %270 = vmatprep.subr.mxu0 0.0
    %271 = vmatpush1.msra.mxu0 0.0
    %272 = vmatprep.subr.mxu0 0.0
    %273 = vmatpush1.msra.mxu0 0.0
    %274 = vmatprep.subr.mxu0 0.0
    %275 = vmatpush1.msra.mxu0 0.0
    %276 = vmatprep.subr.mxu0 0.0
    %277 = vmatpush1.msra.mxu0 0.0
    %278 = vmatprep.subr.mxu0 0.0
    %279 = vmatpush1.msra.mxu0 0.0
    %280 = vmatprep.subr.mxu0 0.0
    %281 = vmatpush1.msra.mxu0 0.0
    %282 = vmatprep.subr.mxu0 0.0
    %283 = vmatpush1.msra.mxu0 0.0
    %284 = vmatprep.subr.mxu0 0.0
    %285 = vmatpush1.msra.mxu0 0.0
    %286 = vmatprep.subr.mxu0 0.0
    %287 = vmatpush1.msra.mxu0 0.0
    %288 = vmatprep.subr.mxu0 0.0
    %289 = vmatpush1.msra.mxu0 0.0
    %290 = vmatprep.subr.mxu0 0.0
    %291 = vmatpush1.msra.mxu0 0.0
    %292 = vmatprep.subr.mxu0 0.0
    %293 = vmatpush1.msra.mxu0 0.0
    %294 = vmatprep.subr.mxu0 0.0
    %295 = vmatpush1.msra.mxu0 0.0
    %296 = vmatprep.subr.mxu0 0.0
    %297 = vmatpush1.msra.mxu0 0.0
    %298 = vmatprep.subr.mxu0 0.0
    %299 = vmatpush1.msra.mxu0 0.0
    %300 = vmatprep.subr.mxu0 0.0
    %301 = vmatpush1.msra.mxu0 0.0
    %302 = vmatprep.subr.mxu0 0.0
    %303 = vmatpush1.msra.mxu0 0.0
    %304 = vmatprep.subr.mxu0 0.0
    %305 = vmatpush1.msra.mxu0 0.0
    %306 = vmatprep.subr.mxu0 0.0
    %307 = vmatpush1.msra.mxu0 0.0
    %308 = vmatprep.subr.mxu0 0.0
    %309 = vmatpush1.msra.mxu0 0.0
    %310 = vmatprep.subr.mxu0 0.0
    %311 = vmatpush1.msra.mxu0 0.0
    %312 = vmatprep.subr.mxu0 0.0
    %313 = vmatpush1.msra.mxu0 0.0
    %314 = vmatprep.subr.mxu0 0.0
    %315 = vmatpush1.msra.mxu0 0.0
    %316 = vmatprep.subr.mxu0 0.0
    %317 = vmatpush1.msra.mxu0 0.0
    %318 = vmatprep.subr.mxu0 0.0
    %319 = vmatpush1.msra.mxu0 0.0
    %320 = vmatprep.subr.mxu0 0.0
    %321 = vmatpush1.msra.mxu0 0.0
    %322 = vmatprep.subr.mxu0 0.0
    %323 = vmatpush1.msra.mxu0 0.0
    %324 = vmatprep.subr.mxu0 0.0
    %325 = vmatpush1.msra.mxu0 0.0
    %326 = vmatprep.subr.mxu0 0.0
    %327 = vmatpush1.msra.mxu0 0.0
    %328 = vmatprep.subr.mxu0 0.0
    %329 = vmatpush1.msra.mxu0 0.0
    %330 = vmatprep.mubr.f32.mxu0 0.0
    %331 = vmatmul.mubr.f32.gmra.mrb[0].mxu0 %v261
    %v332 = vpop.f32.mrb[0].mxu0
    %v333 = vadd.f32 %v258, %v332
    %v334 = vpop.f32.mrb[0].mxu0
    %335 = vmatprep.mubr.f32.mxu0 0.0
    %336 = vmatmul.mubr.f32.gmra.mrb[0].mxu0 %v264
    %v337 = vpop.f32.mrb[0].mxu0
    %v338 = vadd.f32 %v258, %v337
    %v339 = vpop.f32.mrb[0].mxu0
    %340 = vdwg.mxu0
    %v341 = vmax.f32 %v333, 0.0
    %v342 = vmax.f32 %v338, 0.0
    %v343 = vld [vmem:[#allocation5] sm:$0xff]
    %v344 = vld [vmem:[#allocation5 + $0x8] sm:$0xff]
    %v345 = vld [vmem:[#allocation7] sm:$0x1]
    %v346 = vld [vmem:[%s8] sm:$0xff]
    %v347 = vld [vmem:[%s8 + $0x8] sm:$0xff]
    %v348 = vld [vmem:[%s9] sm:$0x1]
    %349 = vmatprep.subr.mxu0 0.0
    %350 = vmatpush1.msra.mxu0 %v341
    %351 = vmatprep.subr.mxu0 0.0
    %352 = vmatpush1.msra.mxu0 %v342
    %353 = vmatprep.subr.mxu0 0.0
    %354 = vmatpush1.msra.mxu0 0.0
    %355 = vmatprep.subr.mxu0 0.0
    %356 = vmatpush1.msra.mxu0 0.0
    %357 = vmatprep.subr.mxu0 0.0
    %358 = vmatpush1.msra.mxu0 0.0
    %359 = vmatprep.subr.mxu0 0.0
    %360 = vmatpush1.msra.mxu0 0.0
    %361 = vmatprep.subr.mxu0 0.0
    %362 = vmatpush1.msra.mxu0 0.0
    %363 = vmatprep.subr.mxu0 0.0
    %364 = vmatpush1.msra.mxu0 0.0
    %365 = vmatprep.subr.mxu0 0.0
    %366 = vmatpush1.msra.mxu0 0.0
    %367 = vmatprep.subr.mxu0 0.0
    %368 = vmatpush1.msra.mxu0 0.0
    %369 = vmatprep.subr.mxu0 0.0
    %370 = vmatpush1.msra.mxu0 0.0
    %371 = vmatprep.subr.mxu0 0.0
    %372 = vmatpush1.msra.mxu0 0.0
    %373 = vmatprep.subr.mxu0 0.0
    %374 = vmatpush1.msra.mxu0 0.0
    %375 = vmatprep.subr.mxu0 0.0
    %376 = vmatpush1.msra.mxu0 0.0
    %377 = vmatprep.subr.mxu0 0.0
    %378 = vmatpush1.msra.mxu0 0.0
    %379 = vmatprep.subr.mxu0 0.0
    %380 = vmatpush1.msra.mxu0 0.0
    %381 = vmatprep.subr.mxu0 0.0
    %382 = vmatpush1.msra.mxu0 0.0
    %383 = vmatprep.subr.mxu0 0.0
    %384 = vmatpush1.msra.mxu0 0.0
    %385 = vmatprep.subr.mxu0 0.0
    %386 = vmatpush1.msra.mxu0 0.0
    %387 = vmatprep.subr.mxu0 0.0
    %388 = vmatpush1.msra.mxu0 0.0
    %389 = vmatprep.subr.mxu0 0.0
    %390 = vmatpush1.msra.mxu0 0.0
    %391 = vmatprep.subr.mxu0 0.0
    %392 = vmatpush1.msra.mxu0 0.0
    %393 = vmatprep.subr.mxu0 0.0
    %394 = vmatpush1.msra.mxu0 0.0
    %395 = vmatprep.subr.mxu0 0.0
    %396 = vmatpush1.msra.mxu0 0.0
    %397 = vmatprep.subr.mxu0 0.0
    %398 = vmatpush1.msra.mxu0 0.0
    %399 = vmatprep.subr.mxu0 0.0
    %400 = vmatpush1.msra.mxu0 0.0
    %401 = vmatprep.subr.mxu0 0.0
    %402 = vmatpush1.msra.mxu0 0.0
    %403 = vmatprep.subr.mxu0 0.0
    %404 = vmatpush1.msra.mxu0 0.0
    %405 = vmatprep.subr.mxu0 0.0
    %406 = vmatpush1.msra.mxu0 0.0
    %407 = vmatprep.subr.mxu0 0.0
    %408 = vmatpush1.msra.mxu0 0.0
    %409 = vmatprep.subr.mxu0 0.0
    %410 = vmatpush1.msra.mxu0 0.0
    %411 = vmatprep.subr.mxu0 0.0
    %412 = vmatpush1.msra.mxu0 0.0
    %413 = vmatprep.mubr.f32.mxu0 0.0
    %414 = vmatmul.mubr.f32.gmra.mrb[0].mxu0 %v84
    %v415 = vpop.f32.mrb[0].mxu0
    %v416 = vadd.f32 0.0, %v415
    %v417 = vpop.f32.mrb[0].mxu0
    %418 = vmatprep.mubr.f32.mxu0 0.0
    %419 = vmatmul.mubr.f32.gmra.mrb[0].mxu0 %v87
    %v420 = vpop.f32.mrb[0].mxu0
    %v421 = vadd.f32 0.0, %v420
    %v422 = vpop.f32.mrb[0].mxu0
    %423 = vdwg.mxu0
    %v425 = vlaneseq
    %v426 = vshrl.u32 %v425, 7
    %v427 = vsub.s32 0, %v426
    %v428 = vrot.slane %v345, %v427
    %v431 = vsel %vm82, %v416, 0
    %v434 = vsel %vm82, %v421, 0
    %436 = vmatprep.subr.mxu0 0.0
    %437 = vmatpush1.msra.mxu0 %v343
    %438 = vmatprep.subr.mxu0 0.0
    %439 = vmatpush1.msra.mxu0 %v344
    %440 = vmatprep.subr.mxu0 0.0
    %441 = vmatpush1.msra.mxu0 0.0
    %442 = vmatprep.subr.mxu0 0.0
    %443 = vmatpush1.msra.mxu0 0.0
    %444 = vmatprep.subr.mxu0 0.0
    %445 = vmatpush1.msra.mxu0 0.0
    %446 = vmatprep.subr.mxu0 0.0
    %447 = vmatpush1.msra.mxu0 0.0
    %448 = vmatprep.subr.mxu0 0.0
    %449 = vmatpush1.msra.mxu0 0.0
    %450 = vmatprep.subr.mxu0 0.0
    %451 = vmatpush1.msra.mxu0 0.0
    %452 = vmatprep.subr.mxu0 0.0
    %453 = vmatpush1.msra.mxu0 0.0
    %454 = vmatprep.subr.mxu0 0.0
    %455 = vmatpush1.msra.mxu0 0.0
    %456 = vmatprep.subr.mxu0 0.0
    %457 = vmatpush1.msra.mxu0 0.0
    %458 = vmatprep.subr.mxu0 0.0
    %459 = vmatpush1.msra.mxu0 0.0
    %460 = vmatprep.subr.mxu0 0.0
    %461 = vmatpush1.msra.mxu0 0.0
    %462 = vmatprep.subr.mxu0 0.0
    %463 = vmatpush1.msra.mxu0 0.0
    %464 = vmatprep.subr.mxu0 0.0
    %465 = vmatpush1.msra.mxu0 0.0
    %466 = vmatprep.subr.mxu0 0.0
    %467 = vmatpush1.msra.mxu0 0.0
    %468 = vmatprep.subr.mxu0 0.0
    %469 = vmatpush1.msra.mxu0 0.0
    %470 = vmatprep.subr.mxu0 0.0
    %471 = vmatpush1.msra.mxu0 0.0
    %472 = vmatprep.subr.mxu0 0.0
    %473 = vmatpush1.msra.mxu0 0.0
    %474 = vmatprep.subr.mxu0 0.0
    %475 = vmatpush1.msra.mxu0 0.0
    %476 = vmatprep.subr.mxu0 0.0
    %477 = vmatpush1.msra.mxu0 0.0
    %478 = vmatprep.subr.mxu0 0.0
    %479 = vmatpush1.msra.mxu0 0.0
    %480 = vmatprep.subr.mxu0 0.0
    %481 = vmatpush1.msra.mxu0 0.0
    %482 = vmatprep.subr.mxu0 0.0
    %483 = vmatpush1.msra.mxu0 0.0
    %484 = vmatprep.subr.mxu0 0.0
    %485 = vmatpush1.msra.mxu0 0.0
    %486 = vmatprep.subr.mxu0 0.0
    %487 = vmatpush1.msra.mxu0 0.0
    %488 = vmatprep.subr.mxu0 0.0
    %489 = vmatpush1.msra.mxu0 0.0
    %490 = vmatprep.subr.mxu0 0.0
    %491 = vmatpush1.msra.mxu0 0.0
    %492 = vmatprep.subr.mxu0 0.0
    %493 = vmatpush1.msra.mxu0 0.0
    %494 = vmatprep.subr.mxu0 0.0
    %495 = vmatpush1.msra.mxu0 0.0
    %496 = vmatprep.subr.mxu0 0.0
    %497 = vmatpush1.msra.mxu0 0.0
    %498 = vmatprep.subr.mxu0 0.0
    %499 = vmatpush1.msra.mxu0 0.0
    %500 = vmatprep.mubr.f32.mxu0 0.0
    %501 = vmatmul.mubr.f32.gmra.mrb[0].mxu0 %v431
    %v502 = vpop.f32.mrb[0].mxu0
    %v503 = vadd.f32 %v428, %v502
    %v504 = vpop.f32.mrb[0].mxu0
    %505 = vmatprep.mubr.f32.mxu0 0.0
    %506 = vmatmul.mubr.f32.gmra.mrb[0].mxu0 %v434
    %v507 = vpop.f32.mrb[0].mxu0
    %v508 = vadd.f32 %v428, %v507
    %v509 = vpop.f32.mrb[0].mxu0
    %510 = vdwg.mxu0
    %v511 = vmax.f32 %v503, 0.0
    %v512 = vmax.f32 %v508, 0.0
    %v514 = vlaneseq
    %v515 = vshrl.u32 %v514, 7
    %v516 = vsub.s32 0, %v515
    %v517 = vrot.slane %v348, %v516
    %v520 = vsel %vm82, %v511, 0
    %v523 = vsel %vm82, %v512, 0
    %525 = vmatprep.subr.mxu0 0.0
    %526 = vmatpush1.msra.mxu0 %v346
    %527 = vmatprep.subr.mxu0 0.0
    %528 = vmatpush1.msra.mxu0 %v347
    %529 = vmatprep.subr.mxu0 0.0
    %530 = vmatpush1.msra.mxu0 0.0
    %531 = vmatprep.subr.mxu0 0.0
    %532 = vmatpush1.msra.mxu0 0.0
    %533 = vmatprep.subr.mxu0 0.0
    %534 = vmatpush1.msra.mxu0 0.0
    %535 = vmatprep.subr.mxu0 0.0
    %536 = vmatpush1.msra.mxu0 0.0
    %537 = vmatprep.subr.mxu0 0.0
    %538 = vmatpush1.msra.mxu0 0.0
    %539 = vmatprep.subr.mxu0 0.0
    %540 = vmatpush1.msra.mxu0 0.0
    %541 = vmatprep.subr.mxu0 0.0
    %542 = vmatpush1.msra.mxu0 0.0
    %543 = vmatprep.subr.mxu0 0.0
    %544 = vmatpush1.msra.mxu0 0.0
    %545 = vmatprep.subr.mxu0 0.0
    %546 = vmatpush1.msra.mxu0 0.0
    %547 = vmatprep.subr.mxu0 0.0
    %548 = vmatpush1.msra.mxu0 0.0
    %549 = vmatprep.subr.mxu0 0.0
    %550 = vmatpush1.msra.mxu0 0.0
    %551 = vmatprep.subr.mxu0 0.0
    %552 = vmatpush1.msra.mxu0 0.0
    %553 = vmatprep.subr.mxu0 0.0
    %554 = vmatpush1.msra.mxu0 0.0
    %555 = vmatprep.subr.mxu0 0.0
    %556 = vmatpush1.msra.mxu0 0.0
    %557 = vmatprep.subr.mxu0 0.0
    %558 = vmatpush1.msra.mxu0 0.0
    %559 = vmatprep.subr.mxu0 0.0
    %560 = vmatpush1.msra.mxu0 0.0
    %561 = vmatprep.subr.mxu0 0.0
    %562 = vmatpush1.msra.mxu0 0.0
    %563 = vmatprep.subr.mxu0 0.0
    %564 = vmatpush1.msra.mxu0 0.0
    %565 = vmatprep.subr.mxu0 0.0
    %566 = vmatpush1.msra.mxu0 0.0
    %567 = vmatprep.subr.mxu0 0.0
    %568 = vmatpush1.msra.mxu0 0.0
    %569 = vmatprep.subr.mxu0 0.0
    %570 = vmatpush1.msra.mxu0 0.0
    %571 = vmatprep.subr.mxu0 0.0
    %572 = vmatpush1.msra.mxu0 0.0
    %573 = vmatprep.subr.mxu0 0.0
    %574 = vmatpush1.msra.mxu0 0.0
    %575 = vmatprep.subr.mxu0 0.0
    %576 = vmatpush1.msra.mxu0 0.0
    %577 = vmatprep.subr.mxu0 0.0
    %578 = vmatpush1.msra.mxu0 0.0
    %579 = vmatprep.subr.mxu0 0.0
    %580 = vmatpush1.msra.mxu0 0.0
    %581 = vmatprep.subr.mxu0 0.0
    %582 = vmatpush1.msra.mxu0 0.0
    %583 = vmatprep.subr.mxu0 0.0
    %584 = vmatpush1.msra.mxu0 0.0
    %585 = vmatprep.subr.mxu0 0.0
    %586 = vmatpush1.msra.mxu0 0.0
    %587 = vmatprep.subr.mxu0 0.0
    %588 = vmatpush1.msra.mxu0 0.0
    %589 = vmatprep.mubr.f32.mxu0 0.0
    %590 = vmatmul.mubr.f32.gmra.mrb[0].mxu0 %v520
    %v591 = vpop.f32.mrb[0].mxu0
    %v592 = vadd.f32 %v517, %v591
    %v593 = vpop.f32.mrb[0].mxu0
    %594 = vmatprep.mubr.f32.mxu0 0.0
    %595 = vmatmul.mubr.f32.gmra.mrb[0].mxu0 %v523
    %v596 = vpop.f32.mrb[0].mxu0
    %v597 = vadd.f32 %v517, %v596
    %v598 = vpop.f32.mrb[0].mxu0
    %599 = vdwg.mxu0
    %v600 = vmax.f32 %v592, 0.0
    %v601 = vmax.f32 %v597, 0.0
    %602 = vst.msk [vmem:[#allocation8] sm:$0xff] %vm82, %v600
    %603 = vst.msk [vmem:[#allocation8 + $0x8] sm:$0xff] %vm82, %v601
    // Predicated region
    $region54: #{tpu_custom_call.1} parent=1 // pred_check
      _
    $region55: #{tpu_custom_call.1} parent=1 // pred_check_branch
      %605 = sbr.rel (0) target = $region57
    $region56: #{tpu_custom_call.1} parent=1 // pred_region
      %s607 = ssub.s32 256, 256
      %608 = vsyncadd [#allocation4], %s607
      %s609 = sshll.u32 [#allocation8], 4
      %s610 = int_to_ptr.vmem [resolvable:$true] %s609
      %615 = dma.vmem_to_hbm [thread:$0]  %s610, 256, %s10, [#allocation4], 128, 128, 8
    $region57: #{tpu_custom_call.1} parent=1 // pred_fallthru
      _
    // Predicated region
    $region58: #{tpu_custom_call.1} parent=1 // pred_check
      _
    $region59: #{tpu_custom_call.1} parent=1 // pred_check_branch
      %617 = sbr.rel (0) target = $region61
    $region60: #{tpu_custom_call.1} parent=1 // pred_region
      %618 = dma.done [#allocation4], 256
    $region61: #{tpu_custom_call.1} parent=1 // pred_fallthru
      _
    %619 = vsyncpa [#allocation3], 1
    %620 = vsyncpa [#allocation6], 1
    %621 = vsyncpa [#allocation4], 1

</llo_original>
